<compile_context>
chip_gen: v6e
topology: v6e:2x2x1
jax: 0.10.0
libtpu: 0.0.40
codegen_flags: <defaults>
</compile_context>

<pallas_src>
import math

import jax
import jax.numpy as jnp
import numpy as np
from jax import lax
from jax.experimental import pallas as pl
from jax.experimental.pallas import tpu as pltpu


def _round_up(x, m):
    return ((x + m - 1) // m) * m


def _cdiv(a, b):
    return -(-a // b)


def _U(v):
    return np.uint32(v & 0xFFFFFFFF)


def _mix32(x):
    """lowbias32-style finalizer: good avalanche, plain VPU integer ops."""
    x = (x ^ (x >> _U(16))) * _U(0x7FEB352D)
    x = (x ^ (x >> _U(15))) * _U(0x846CA68B)
    x = x ^ (x >> _U(16))
    return x


def _make_mlp_kernel(num_hidden, act_func, p, mxu_dtype):
    """Builds the fused MLP kernel body (closed over static config only)."""
    act = jnp.tanh if act_func == "tanh" else (lambda t: jnp.maximum(t, 0.0))
    use_dropout = (p > 0.0) and (num_hidden > 0)
    # Keep an element iff its hashed 32 bits are >= p * 2^32  (P(keep) = 1-p).
    drop_thresh = _U(min(int(round(p * float(1 << 32))), (1 << 32) - 1))
    inv_keep = np.float32(1.0 / (1.0 - p)) if use_dropout else np.float32(1.0)

    def kernel(seed_ref, *refs):
        # refs = (x, w_1, b_1, ..., w_out, b_out, out)
        x_ref = refs[0]
        out_ref = refs[-1]
        prm = refs[1:-1]

        if use_dropout:
            # Distinct, decorrelated stream per (seed, batch tile, MC sample):
            # scalars are mixed through multiplicative constants, then each
            # (layer, row, col) counter is run through _mix32.
            seed_u = seed_ref[0].astype(jnp.uint32)
            tile_u = pl.program_id(0).astype(jnp.uint32)
            samp_u = pl.program_id(1).astype(jnp.uint32)
            base = ((seed_u * _U(0x9E3779B1))
                    ^ (tile_u * _U(0x85EBCA77))
                    ^ (samp_u * _U(0xC2B2AE3D)))

        h = x_ref[...]  # already mxu_dtype (bf16 default): half-width DMA
        for li in range(num_hidden):
            w = prm[2 * li][...]
            b = prm[2 * li + 1][...]
            z = jnp.dot(h.astype(mxu_dtype), w,
                        preferred_element_type=jnp.float32) + b
            h = act(z)  # f32 elementwise path (VPU/EUP)
            if use_dropout:
                # Counter-based PRNG: plain jnp ops (no pltpu.prng_* needed).
                row = lax.broadcasted_iota(jnp.int32, h.shape, 0).astype(jnp.uint32)
                col = lax.broadcasted_iota(jnp.int32, h.shape, 1).astype(jnp.uint32)
                v = (base + _U((li + 1) * 0x27220A95)
                     + row * _U(0x9E3779B9) + col * _U(0x6C62272E))
                bits = _mix32(v)
                # Always-on Bayesian dropout; 1/(1-p) rescale in f32 (not
                # folded into bf16 weights -> no precision loss for large p).
                h = jnp.where(bits >= drop_thresh, h * inv_keep, 0.0)

        w_out = prm[-2][...]
        b_out = prm[-1][...]
        # TODO(synk): output_size < 128 lanes -> masked vst partial stores; a
        # lane-padded w_out/out (sliced in the wrapper) would remove them, but
        # the kernel is HBM-bound on the x stream so it's not worth the extra
        # output bytes at these sizes.
        out_ref[...] = (
            jnp.dot(h.astype(mxu_dtype), w_out,
                    preferred_element_type=jnp.float32) + b_out
        ).astype(out_ref.dtype)

    return kernel


class BayesDropoutMLP:
    """JAX/Pallas re-implementation of the PyTorch BayesDropoutMLP forward."""

    def __init__(self, input_size, hidden_sizes, output_size, act_func, p, key,
                 mxu_dtype=jnp.bfloat16, batch_tile=2048):
        if not (0.0 <= float(p) < 1.0):
            raise ValueError("p must be in [0, 1) for this kernel")
        self.input_size = input_size
        self.hidden_sizes = list(hidden_sizes)
        if output_size:
            self.output_size = output_size
            self.squeeze_output = False
        else:
            self.output_size = 1
            self.squeeze_output = True
        self.act_func = act_func
        self.p = float(p)
        self.mxu_dtype = jnp.dtype(mxu_dtype)
        self.batch_tile = int(batch_tile)

        # PyTorch-style Linear init: U(-1/sqrt(fan_in), +1/sqrt(fan_in)).
        # Weights stored (in, out) in mxu_dtype; biases stay f32 (added after
        # the f32 MXU accumulation).
        dims = [input_size] + self.hidden_sizes + [self.output_size]
        self.params = []  # flat list [w1, b1, ..., w_out, b_out]
        for in_d, out_d in zip(dims[:-1], dims[1:]):
            key, kw, kb = jax.random.split(key, 3)
            bound = 1.0 / math.sqrt(in_d)
            w = jax.random.uniform(kw, (in_d, out_d), jnp.float32, -bound, bound)
            b = jax.random.uniform(kb, (1, out_d), jnp.float32, -bound, bound)
            self.params.append(w.astype(self.mxu_dtype))
            self.params.append(b)

        self._kernel = _make_mlp_kernel(len(self.hidden_sizes), act_func,
                                        self.p, self.mxu_dtype)

    def __call__(self, x, seed=0, num_samples=1):
        num_samples = int(num_samples)
        x2d = x.reshape(-1, self.input_size)
        # Feed x at the MXU dtype: halves the dominant HBM stream. (Callers
        # already holding bf16 activations skip the wrapper cast entirely.)
        if x2d.dtype != self.mxu_dtype:
            x2d = x2d.astype(self.mxu_dtype)
        batch = x2d.shape[0]

        # Batch tile: big enough to amortize ~0.35us/grid-step, capped so the
        # batch splits into >=2 tiles when possible (v7x has 2 TCs), always a
        # multiple of 8.
        tb = _round_up(min(self.batch_tile, batch), 8)
        if batch > 8:
            tb = min(tb, max(8, _round_up(_cdiv(batch, 2), 8)))
        num_tiles = _cdiv(batch, tb)

        # Sample axis innermost: x block index constant over it -> x is DMA'd
        # once per batch tile, NOT once per Monte-Carlo sample (no jnp.tile).
        grid = (num_tiles, num_samples)
        seed_arr = jnp.asarray([seed], dtype=jnp.int32)

        in_specs = [pl.BlockSpec((tb, self.input_size), lambda i, s, sd: (i, 0))]
        for prm in self.params:
            # Constant block index -> weights/biases stay VMEM-resident.
            # TODO(synk): pipeline_mode=pl.Buffered(1) would drop their unused
            # second buffer; only matters for very wide hidden layers.
            in_specs.append(pl.BlockSpec(prm.shape, lambda i, s, sd: (0, 0)))
        out_specs = pl.BlockSpec((None, tb, self.output_size),
                                 lambda i, s, sd: (s, i, 0))

        grid_spec = pltpu.PrefetchScalarGridSpec(
            num_scalar_prefetch=1,   # seed -> SMEM
            grid=grid,
            in_specs=in_specs,
            out_specs=out_specs,
        )

        # VMEM budget from actual bytes (double-buffered tiles + resident
        # params + f32 activation headroom), clamped for v5e/v6e/v7x.
        param_bytes = sum(int(p.size) * p.dtype.itemsize for p in self.params)
        x_tile_bytes = tb * self.input_size * x2d.dtype.itemsize
        out_tile_bytes = tb * self.output_size * 4
        widest = max(self.hidden_sizes + [self.output_size, self.input_size])
        act_bytes = 4 * tb * widest * 4
        vmem_needed = 2 * (x_tile_bytes + out_tile_bytes + param_bytes) + act_bytes
        vmem_limit = int(min(max(vmem_needed + (8 << 20), 32 << 20), 48 << 20))

        # Advisory cost hint for XLA's scheduler.
        dims = [self.input_size] + self.hidden_sizes + [self.output_size]
        rows = batch * num_samples
        flops = 2 * rows * sum(a * b for a, b in zip(dims[:-1], dims[1:]))
        transcendentals = (rows * sum(self.hidden_sizes)
                           if self.act_func == "tanh" else 0)
        bytes_accessed = (x2d.size * x2d.dtype.itemsize + param_bytes
                          + rows * self.output_size * 4)

        out = pl.pallas_call(
            self._kernel,
            out_shape=jax.ShapeDtypeStruct(
                (num_samples, batch, self.output_size), jnp.float32),
            grid_spec=grid_spec,
            compiler_params=pltpu.CompilerParams(
                # both axes independent -> megacore-shardable on v7x
                dimension_semantics=("parallel", "parallel"),
                vmem_limit_bytes=vmem_limit,
            ),
            cost_estimate=pl.CostEstimate(
                flops=int(flops),
                transcendentals=int(transcendentals),
                bytes_accessed=int(bytes_accessed),
            ),
        )(seed_arr, x2d, *self.params)

        if num_samples == 1:
            out = out[0]
        if self.squeeze_output:
            out = jnp.squeeze(out)  # matches torch.squeeze(logits)
        return out


def _reference_forward(model, x):
    """Pure-JAX reference mirroring the kernel math (dropout-free path)."""
    h = x.reshape(-1, model.input_size).astype(model.mxu_dtype)
    act = jnp.tanh if model.act_func == "tanh" else (lambda t: jnp.maximum(t, 0.0))
    for li in range(len(model.hidden_sizes)):
        w, b = model.params[2 * li], model.params[2 * li + 1]
        h = act(jnp.dot(h.astype(w.dtype), w,
                        preferred_element_type=jnp.float32) + b)
    w_out, b_out = model.params[-2], model.params[-1]
    out = jnp.dot(h.astype(w_out.dtype), w_out,
                  preferred_element_type=jnp.float32) + b_out
    if model.squeeze_output:
        out = jnp.squeeze(out)
    return out


if __name__ == "__main__":
    key = jax.random.PRNGKey(0)
    key, k_x, k_p1, k_p0 = jax.random.split(key, 4)

    # x is [2, 4, 16, 16]; view(-1, 256) -> (8, 256).
    input_size = 16 * 16
    hidden_sizes = [128, 128]
    output_size = 8
    x = jax.random.normal(k_x, (2, 4, 16, 16), jnp.float32)

    # Always-on Bayesian dropout (p=0.5), relu, bf16 MXU path.
    model = BayesDropoutMLP(input_size, hidden_sizes, output_size,
                            act_func="relu", p=0.5, key=k_p1)
    logits = model(x, seed=1234)
    jax.block_until_ready(logits)
    assert logits.shape == (8, output_size)
    assert bool(jnp.all(jnp.isfinite(logits)))
    # Deterministic for a fixed seed, different across seeds.
    logits2 = model(x, seed=1234)
    assert bool(jnp.array_equal(logits, logits2))
    logits3 = model(x, seed=4321)
    assert not bool(jnp.array_equal(logits, logits3))

    # Monte-Carlo path: 32 samples via the sample grid axis; x DMA'd once per
    # batch tile, independent dropout masks per sample.
    mc = model(x, seed=7, num_samples=32)
    jax.block_until_ready(mc)
    assert mc.shape == (32, 8, output_size)
    assert bool(jnp.all(jnp.isfinite(mc)))
    assert not bool(jnp.array_equal(mc[0], mc[1]))

    # Exact-path correctness: p=0 (no dropout), f32 MXU, vs pure-JAX reference.
    model0 = BayesDropoutMLP(input_size, hidden_sizes, output_size,
                             act_func="tanh", p=0.0, key=k_p0,
                             mxu_dtype=jnp.float32)
    got = model0(x, seed=0)
    want = _reference_forward(model0, x)
    jax.block_until_ready(got)
    assert jnp.allclose(got, want, atol=1e-4, rtol=1e-4), float(
        jnp.max(jnp.abs(got - want)))

    print("KERNEL_OK")
</pallas_src>

<mosaic_0001>
module attributes {stable_mosaic.version = 11 : i64} {
  func.func @kernel(%arg0: i32, %arg1: i32, %arg2: memref<1xi32, #tpu.memory_space<smem>>, %arg3: memref<8x256xbf16, #tpu.memory_space<vmem>>, %arg4: memref<256x128xbf16, #tpu.memory_space<vmem>>, %arg5: memref<1x128xf32, #tpu.memory_space<vmem>>, %arg6: memref<128x128xbf16, #tpu.memory_space<vmem>>, %arg7: memref<1x128xf32, #tpu.memory_space<vmem>>, %arg8: memref<128x8xbf16, #tpu.memory_space<vmem>>, %arg9: memref<1x8xf32, #tpu.memory_space<vmem>>, %arg10: memref<1x8x8xf32, #tpu.memory_space<vmem>>) attributes {dimension_semantics = [#tpu.dimension_semantics<parallel>, #tpu.dimension_semantics<parallel>], iteration_bounds = array<i64: 1, 1>, scalar_prefetch = 1 : i64, scratch_operands = 0 : i64, tpu.core_type = #tpu.core_type<tc>, window_params = [{transform_indices = @transform_0, window_bounds = array<i64: 8, 256>}, {pipeline_mode = #tpu.pipeline_mode<synchronous>, transform_indices = @transform_1, window_bounds = array<i64: 256, 128>}, {pipeline_mode = #tpu.pipeline_mode<synchronous>, transform_indices = @transform_2, window_bounds = array<i64: 1, 128>}, {pipeline_mode = #tpu.pipeline_mode<synchronous>, transform_indices = @transform_3, window_bounds = array<i64: 128, 128>}, {pipeline_mode = #tpu.pipeline_mode<synchronous>, transform_indices = @transform_4, window_bounds = array<i64: 1, 128>}, {pipeline_mode = #tpu.pipeline_mode<synchronous>, transform_indices = @transform_5, window_bounds = array<i64: 128, 8>}, {pipeline_mode = #tpu.pipeline_mode<synchronous>, transform_indices = @transform_6, window_bounds = array<i64: 1, 8>}, {transform_indices = @transform_7, window_bounds = array<i64: 1, 8, 8>}]} {
    %c0 = arith.constant 0 : index
    %0 = memref.load %arg2[%c0] : memref<1xi32, #tpu.memory_space<smem>>
    %c-1640531535_i32 = arith.constant -1640531535 : i32
    %1 = arith.muli %0, %c-1640531535_i32 : i32
    %c-2048144777_i32 = arith.constant -2048144777 : i32
    %2 = arith.muli %arg0, %c-2048144777_i32 : i32
    %3 = arith.xori %1, %2 : i32
    %c-1028477379_i32 = arith.constant -1028477379 : i32
    %4 = arith.muli %arg1, %c-1028477379_i32 : i32
    %5 = arith.xori %3, %4 : i32
    %c0_0 = arith.constant 0 : index
    %c0_1 = arith.constant 0 : index
    %6 = vector.load %arg3[%c0_0, %c0_1] : memref<8x256xbf16, #tpu.memory_space<vmem>>, vector<8x256xbf16>
    %c0_2 = arith.constant 0 : index
    %c0_3 = arith.constant 0 : index
    %7 = vector.load %arg4[%c0_2, %c0_3] : memref<256x128xbf16, #tpu.memory_space<vmem>>, vector<256x128xbf16>
    %c0_4 = arith.constant 0 : index
    %c0_5 = arith.constant 0 : index
    %8 = vector.load %arg5[%c0_4, %c0_5] : memref<1x128xf32, #tpu.memory_space<vmem>>, vector<1x128xf32>
    %cst = arith.constant dense<0.000000e+00> : vector<8x128xf32>
    %9 = tpu.matmul %6, %7, %cst {dimension_numbers = #tpu.dot_dimension_numbers<[1], [0], [0], [1], [0, 0, 1, 1], [], []>} : vector<8x256xbf16>, vector<256x128xbf16>, vector<8x128xf32> -> vector<8x128xf32>
    %10 = vector.broadcast %8 : vector<1x128xf32> to vector<8x128xf32>
    %11 = arith.addf %9, %10 : vector<8x128xf32>
    %cst_6 = arith.constant 0.000000e+00 : f32
    %12 = vector.broadcast %cst_6 : f32 to vector<8x128xf32>
    %13 = arith.maximumf %11, %12 : vector<8x128xf32>
    %14 = tpu.iota {dimensions = array<i32: 0>} : vector<8x128xi32>
    %15 = tpu.iota {dimensions = array<i32: 1>} : vector<8x128xi32>
    %c656542357_i32 = arith.constant 656542357 : i32
    %16 = arith.addi %5, %c656542357_i32 : i32
    %c-1640531527_i32 = arith.constant -1640531527 : i32
    %17 = vector.broadcast %c-1640531527_i32 : i32 to vector<8x128xi32>
    %18 = arith.muli %14, %17 : vector<8x128xi32>
    %19 = vector.broadcast %16 : i32 to vector<8x128xi32>
    %20 = arith.addi %19, %18 : vector<8x128xi32>
    %c1818371886_i32 = arith.constant 1818371886 : i32
    %21 = vector.broadcast %c1818371886_i32 : i32 to vector<8x128xi32>
    %22 = arith.muli %15, %21 : vector<8x128xi32>
    %23 = arith.addi %20, %22 : vector<8x128xi32>
    %c16_i32 = arith.constant 16 : i32
    %24 = vector.broadcast %c16_i32 : i32 to vector<8x128xi32>
    %25 = arith.shrui %23, %24 : vector<8x128xi32>
    %26 = arith.xori %23, %25 : vector<8x128xi32>
    %c2146121005_i32 = arith.constant 2146121005 : i32
    %27 = vector.broadcast %c2146121005_i32 : i32 to vector<8x128xi32>
    %28 = arith.muli %26, %27 : vector<8x128xi32>
    %c15_i32 = arith.constant 15 : i32
    %29 = vector.broadcast %c15_i32 : i32 to vector<8x128xi32>
    %30 = arith.shrui %28, %29 : vector<8x128xi32>
    %31 = arith.xori %28, %30 : vector<8x128xi32>
    %c-2073254261_i32 = arith.constant -2073254261 : i32
    %32 = vector.broadcast %c-2073254261_i32 : i32 to vector<8x128xi32>
    %33 = arith.muli %31, %32 : vector<8x128xi32>
    %c16_i32_7 = arith.constant 16 : i32
    %34 = vector.broadcast %c16_i32_7 : i32 to vector<8x128xi32>
    %35 = arith.shrui %33, %34 : vector<8x128xi32>
    %36 = arith.xori %33, %35 : vector<8x128xi32>
    %c-2147483648_i32 = arith.constant -2147483648 : i32
    %37 = vector.broadcast %c-2147483648_i32 : i32 to vector<8x128xi32>
    %38 = arith.cmpi uge, %36, %37 : vector<8x128xi32>
    %cst_8 = arith.constant 2.000000e+00 : f32
    %39 = vector.broadcast %cst_8 : f32 to vector<8x128xf32>
    %40 = arith.mulf %13, %39 : vector<8x128xf32>
    %cst_9 = arith.constant 0.000000e+00 : f32
    %41 = vector.broadcast %cst_9 : f32 to vector<8x128xf32>
    %42 = arith.select %38, %40, %41 : vector<8x128xi1>, vector<8x128xf32>
    %c0_10 = arith.constant 0 : index
    %c0_11 = arith.constant 0 : index
    %43 = vector.load %arg6[%c0_10, %c0_11] : memref<128x128xbf16, #tpu.memory_space<vmem>>, vector<128x128xbf16>
    %c0_12 = arith.constant 0 : index
    %c0_13 = arith.constant 0 : index
    %44 = vector.load %arg7[%c0_12, %c0_13] : memref<1x128xf32, #tpu.memory_space<vmem>>, vector<1x128xf32>
    %45 = arith.truncf %42 : vector<8x128xf32> to vector<8x128xbf16>
    %cst_14 = arith.constant dense<0.000000e+00> : vector<8x128xf32>
    %46 = tpu.matmul %45, %43, %cst_14 {dimension_numbers = #tpu.dot_dimension_numbers<[1], [0], [0], [1], [0, 0, 1, 1], [], []>} : vector<8x128xbf16>, vector<128x128xbf16>, vector<8x128xf32> -> vector<8x128xf32>
    %47 = vector.broadcast %44 : vector<1x128xf32> to vector<8x128xf32>
    %48 = arith.addf %46, %47 : vector<8x128xf32>
    %cst_15 = arith.constant 0.000000e+00 : f32
    %49 = vector.broadcast %cst_15 : f32 to vector<8x128xf32>
    %50 = arith.maximumf %48, %49 : vector<8x128xf32>
    %51 = tpu.iota {dimensions = array<i32: 0>} : vector<8x128xi32>
    %52 = tpu.iota {dimensions = array<i32: 1>} : vector<8x128xi32>
    %c1313084714_i32 = arith.constant 1313084714 : i32
    %53 = arith.addi %5, %c1313084714_i32 : i32
    %c-1640531527_i32_16 = arith.constant -1640531527 : i32
    %54 = vector.broadcast %c-1640531527_i32_16 : i32 to vector<8x128xi32>
    %55 = arith.muli %51, %54 : vector<8x128xi32>
    %56 = vector.broadcast %53 : i32 to vector<8x128xi32>
    %57 = arith.addi %56, %55 : vector<8x128xi32>
    %c1818371886_i32_17 = arith.constant 1818371886 : i32
    %58 = vector.broadcast %c1818371886_i32_17 : i32 to vector<8x128xi32>
    %59 = arith.muli %52, %58 : vector<8x128xi32>
    %60 = arith.addi %57, %59 : vector<8x128xi32>
    %c16_i32_18 = arith.constant 16 : i32
    %61 = vector.broadcast %c16_i32_18 : i32 to vector<8x128xi32>
    %62 = arith.shrui %60, %61 : vector<8x128xi32>
    %63 = arith.xori %60, %62 : vector<8x128xi32>
    %c2146121005_i32_19 = arith.constant 2146121005 : i32
    %64 = vector.broadcast %c2146121005_i32_19 : i32 to vector<8x128xi32>
    %65 = arith.muli %63, %64 : vector<8x128xi32>
    %c15_i32_20 = arith.constant 15 : i32
    %66 = vector.broadcast %c15_i32_20 : i32 to vector<8x128xi32>
    %67 = arith.shrui %65, %66 : vector<8x128xi32>
    %68 = arith.xori %65, %67 : vector<8x128xi32>
    %c-2073254261_i32_21 = arith.constant -2073254261 : i32
    %69 = vector.broadcast %c-2073254261_i32_21 : i32 to vector<8x128xi32>
    %70 = arith.muli %68, %69 : vector<8x128xi32>
    %c16_i32_22 = arith.constant 16 : i32
    %71 = vector.broadcast %c16_i32_22 : i32 to vector<8x128xi32>
    %72 = arith.shrui %70, %71 : vector<8x128xi32>
    %73 = arith.xori %70, %72 : vector<8x128xi32>
    %c-2147483648_i32_23 = arith.constant -2147483648 : i32
    %74 = vector.broadcast %c-2147483648_i32_23 : i32 to vector<8x128xi32>
    %75 = arith.cmpi uge, %73, %74 : vector<8x128xi32>
    %cst_24 = arith.constant 2.000000e+00 : f32
    %76 = vector.broadcast %cst_24 : f32 to vector<8x128xf32>
    %77 = arith.mulf %50, %76 : vector<8x128xf32>
    %cst_25 = arith.constant 0.000000e+00 : f32
    %78 = vector.broadcast %cst_25 : f32 to vector<8x128xf32>
    %79 = arith.select %75, %77, %78 : vector<8x128xi1>, vector<8x128xf32>
    %c0_26 = arith.constant 0 : index
    %c0_27 = arith.constant 0 : index
    %80 = vector.load %arg8[%c0_26, %c0_27] : memref<128x8xbf16, #tpu.memory_space<vmem>>, vector<128x8xbf16>
    %c0_28 = arith.constant 0 : index
    %c0_29 = arith.constant 0 : index
    %81 = vector.load %arg9[%c0_28, %c0_29] : memref<1x8xf32, #tpu.memory_space<vmem>>, vector<1x8xf32>
    %82 = arith.truncf %79 : vector<8x128xf32> to vector<8x128xbf16>
    %cst_30 = arith.constant dense<0.000000e+00> : vector<8x8xf32>
    %83 = tpu.matmul %82, %80, %cst_30 {dimension_numbers = #tpu.dot_dimension_numbers<[1], [0], [0], [1], [0, 0, 1, 1], [], []>} : vector<8x128xbf16>, vector<128x8xbf16>, vector<8x8xf32> -> vector<8x8xf32>
    %84 = vector.broadcast %81 : vector<1x8xf32> to vector<8x8xf32>
    %85 = arith.addf %83, %84 : vector<8x8xf32>
    %c0_31 = arith.constant 0 : index
    %c0_32 = arith.constant 0 : index
    %c0_33 = arith.constant 0 : index
    %86 = vector.load %arg10[%c0_31, %c0_32, %c0_33] : memref<1x8x8xf32, #tpu.memory_space<vmem>>, vector<1x8x8xf32>
    %87 = vector.shape_cast %86 : vector<1x8x8xf32> to vector<8x8xf32>
    %88 = vector.shape_cast %85 : vector<8x8xf32> to vector<1x8x8xf32>
    tpu.vector_store %arg10[%c0_31, %c0_32, %c0_33], %88 {strides = array<i32>} : memref<1x8x8xf32, #tpu.memory_space<vmem>>, vector<1x8x8xf32>,
    return
  }
  func.func @transform_0(%arg0: i32, %arg1: i32, %arg2: memref<1xi32, #tpu.memory_space<smem>>) -> (i32, i32) {
    %c0_i32 = arith.constant 0 : i32
    %c0_i32_0 = arith.constant 0 : i32
    return %arg0, %c0_i32 : i32, i32
  }
  func.func @transform_1(%arg0: i32, %arg1: i32, %arg2: memref<1xi32, #tpu.memory_space<smem>>) -> (i32, i32) {
    %c0_i32 = arith.constant 0 : i32
    %c0_i32_0 = arith.constant 0 : i32
    %c0_i32_1 = arith.constant 0 : i32
    return %c0_i32, %c0_i32_0 : i32, i32
  }
  func.func @transform_2(%arg0: i32, %arg1: i32, %arg2: memref<1xi32, #tpu.memory_space<smem>>) -> (i32, i32) {
    %c0_i32 = arith.constant 0 : i32
    %c0_i32_0 = arith.constant 0 : i32
    %c0_i32_1 = arith.constant 0 : i32
    return %c0_i32, %c0_i32_0 : i32, i32
  }
  func.func @transform_3(%arg0: i32, %arg1: i32, %arg2: memref<1xi32, #tpu.memory_space<smem>>) -> (i32, i32) {
    %c0_i32 = arith.constant 0 : i32
    %c0_i32_0 = arith.constant 0 : i32
    %c0_i32_1 = arith.constant 0 : i32
    return %c0_i32, %c0_i32_0 : i32, i32
  }
  func.func @transform_4(%arg0: i32, %arg1: i32, %arg2: memref<1xi32, #tpu.memory_space<smem>>) -> (i32, i32) {
    %c0_i32 = arith.constant 0 : i32
    %c0_i32_0 = arith.constant 0 : i32
    %c0_i32_1 = arith.constant 0 : i32
    return %c0_i32, %c0_i32_0 : i32, i32
  }
  func.func @transform_5(%arg0: i32, %arg1: i32, %arg2: memref<1xi32, #tpu.memory_space<smem>>) -> (i32, i32) {
    %c0_i32 = arith.constant 0 : i32
    %c0_i32_0 = arith.constant 0 : i32
    %c0_i32_1 = arith.constant 0 : i32
    return %c0_i32, %c0_i32_0 : i32, i32
  }
  func.func @transform_6(%arg0: i32, %arg1: i32, %arg2: memref<1xi32, #tpu.memory_space<smem>>) -> (i32, i32) {
    %c0_i32 = arith.constant 0 : i32
    %c0_i32_0 = arith.constant 0 : i32
    %c0_i32_1 = arith.constant 0 : i32
    return %c0_i32, %c0_i32_0 : i32, i32
  }
  func.func @transform_7(%arg0: i32, %arg1: i32, %arg2: memref<1xi32, #tpu.memory_space<smem>>) -> (i32, i32, i32) {
    %c0_i32 = arith.constant 0 : i32
    %c0_i32_0 = arith.constant 0 : i32
    return %arg1, %arg0, %c0_i32 : i32, i32, i32
  }
}

</mosaic_0001>

<llo_original>
// kernel: tpu_custom_call.1
$region0: #{tpu_custom_call.1}
  #allocation0 [shape = 'u32[]', space=smem, size = 0x4, offset = 0x4, fixed_abs, tag = 'smem constant byte address 0x4 - core index']
  #allocation1 [shape = 'u32[144,128]{1,0:T(1,128)}', space=vmem, size = 0x12000, scoped, tag = 'internal scratch']
  #allocation2 [shape = 's32[1]{0}', space=sflag, size = 0x4, scoped, tag = 'scoped memory for tpu_custom_call.1']
  #allocation3 [shape = 's32[1]{0:T(128)S(6)}', space=smem, size = 0x200, scoped, tag = 'prefetched SMEM operand 0']
  %s0 = inlined_call_operand.<no memory space> [shape: s32[1], index: 0, kind: input, shape index: {}]
  %s1 = inlined_call_operand.vmem [shape: bf16[8,256], index: 1, kind: input, shape index: {}]
  %s2 = inlined_call_operand.hbm [shape: bf16[256,128], index: 2, kind: input, shape index: {}]
  %s3 = inlined_call_operand.vmem [shape: f32[1,128], index: 3, kind: input, shape index: {}]
  %s4 = inlined_call_operand.vmem [shape: bf16[128,128], index: 4, kind: input, shape index: {}]
  %s5 = inlined_call_operand.hbm [shape: f32[1,128], index: 5, kind: input, shape index: {}]
  %s6 = inlined_call_operand.vmem [shape: bf16[128,8], index: 6, kind: input, shape index: {}]
  %s7 = inlined_call_operand.vmem [shape: f32[1,8], index: 7, kind: input, shape index: {}]
  %s8 = inlined_call_operand.hbm [shape: f32[1,8,8], index: 8, kind: output, shape index: {}]
  %s9 = sld [smem:[#allocation0]]
  $region46: #{tpu_custom_call.1} parent=0
    _
  %s11 = ssub.s32 1, %s9
  %s12 = scalar_select 0, %s11, %s9
  %13 = sst [smem:[#allocation3]] %s0
  $region1: #{tpu_custom_call.1} parent=0
    #allocation4 [shape = 'u8[65536]{0}', space=vmem, size = 0x10000, scoped, tag = 'input window, operand 2, single buffered']
    #allocation5 [shape = 's32[1]{0}', space=sflag, size = 0x4, scoped, tag = 'scoped memory for tpu_custom_call.1']
    #allocation6 [shape = 's32[1]{0}', space=sflag, size = 0x4, scoped, tag = 'scoped memory for tpu_custom_call.1']
    #allocation7 [shape = 'u8[512]{0}', space=vmem, size = 0x400, scoped, tag = 'input window, operand 5, single buffered']
    #allocation8 [shape = 's32[1]{0}', space=sflag, size = 0x4, scoped, tag = 'scoped memory for tpu_custom_call.1']
    #allocation9 [shape = 'u8[4096]{0}', space=vmem, size = 0x1000, scoped, tag = 'output window, operand 0, single buffered']
    %14 = vsyncpa [#allocation5], 0
    %15 = vsyncpa [#allocation8], 0
    %16 = vsyncpa [#allocation6], 0
    // Predicated region
    $region2: #{tpu_custom_call.1} parent=1 // pred_check
      _
    $region3: #{tpu_custom_call.1} parent=1 // pred_check_branch
      %18 = sbr.rel (0) target = $region5
    $region4: #{tpu_custom_call.1} parent=1 // pred_region
      _
    $region5: #{tpu_custom_call.1} parent=1 // pred_fallthru
      _
    // Predicated region
    $region6: #{tpu_custom_call.1} parent=1 // pred_check
      _
    $region7: #{tpu_custom_call.1} parent=1 // pred_check_branch
      %20 = sbr.rel (0) target = $region9
    $region8: #{tpu_custom_call.1} parent=1 // pred_region
      %s22 = ssub.s32 2048, 2048
      %23 = vsyncadd [#allocation5], %s22
      %s24 = sshll.u32 [#allocation4], 4
      %s25 = int_to_ptr.vmem [resolvable:$true] %s24
      %30 = dma.hbm_to_vmem [thread:$0]  %s2, 2048, %s25, [#allocation5], 64, 64, 4
    $region9: #{tpu_custom_call.1} parent=1 // pred_fallthru
      _
    // Predicated region
    $region10: #{tpu_custom_call.1} parent=1 // pred_check
      _
    $region11: #{tpu_custom_call.1} parent=1 // pred_check_branch
      %32 = sbr.rel (0) target = $region13
    $region12: #{tpu_custom_call.1} parent=1 // pred_region
      _
    $region13: #{tpu_custom_call.1} parent=1 // pred_fallthru
      _
    // Predicated region
    $region14: #{tpu_custom_call.1} parent=1 // pred_check
      _
    $region15: #{tpu_custom_call.1} parent=1 // pred_check_branch
      %34 = sbr.rel (0) target = $region17
    $region16: #{tpu_custom_call.1} parent=1 // pred_region
      _
    $region17: #{tpu_custom_call.1} parent=1 // pred_fallthru
      _
    // Predicated region
    $region18: #{tpu_custom_call.1} parent=1 // pred_check
      _
    $region19: #{tpu_custom_call.1} parent=1 // pred_check_branch
      %36 = sbr.rel (0) target = $region21
    $region20: #{tpu_custom_call.1} parent=1 // pred_region
      %s38 = ssub.s32 16, 16
      %39 = vsyncadd [#allocation8], %s38
      %s41 = sshll.u32 [#allocation7], 4
      %s42 = int_to_ptr.vmem [resolvable:$true] %s41
      %44 = dma.hbm_to_vmem [thread:$0]  %s5, 16, %s42, [#allocation8]
    $region21: #{tpu_custom_call.1} parent=1 // pred_fallthru
      _
    // Predicated region
    $region22: #{tpu_custom_call.1} parent=1 // pred_check
      _
    $region23: #{tpu_custom_call.1} parent=1 // pred_check_branch
      %46 = sbr.rel (0) target = $region25
    $region24: #{tpu_custom_call.1} parent=1 // pred_region
      _
    $region25: #{tpu_custom_call.1} parent=1 // pred_fallthru
      _
    // Predicated region
    $region26: #{tpu_custom_call.1} parent=1 // pred_check
      _
    $region27: #{tpu_custom_call.1} parent=1 // pred_check_branch
      %48 = sbr.rel (0) target = $region29
    $region28: #{tpu_custom_call.1} parent=1 // pred_region
      _
    $region29: #{tpu_custom_call.1} parent=1 // pred_fallthru
      _
    // Predicated region
    $region30: #{tpu_custom_call.1} parent=1 // pred_check
      _
    $region31: #{tpu_custom_call.1} parent=1 // pred_check_branch
      %50 = sbr.rel (0) target = $region33
    $region32: #{tpu_custom_call.1} parent=1 // pred_region
      %51 = dma.done [#allocation5], 2048
    $region33: #{tpu_custom_call.1} parent=1 // pred_fallthru
      _
    // Predicated region
    $region34: #{tpu_custom_call.1} parent=1 // pred_check
      _
    $region35: #{tpu_custom_call.1} parent=1 // pred_check_branch
      %53 = sbr.rel (0) target = $region37
    $region36: #{tpu_custom_call.1} parent=1 // pred_region
      %54 = dma.done [#allocation8], 16
    $region37: #{tpu_custom_call.1} parent=1 // pred_fallthru
      _
    %s56 = sld [smem:[#allocation3]]
    %s57 = smul.u32 %s56, 2654435761
    %s58 = smul.u32 0, 2246822519
    %s59 = sxor.u32 %s57, %s58
    %s60 = smul.u32 0, 3266489917
    %s61 = sxor.u32 %s59, %s60
    %v62 = vld [vmem:[%s1] sm:$0xff]
    %v63 = vld [vmem:[#allocation4] sm:$0xf]
    %v64 = vld [vmem:[#allocation4 + $0x4] sm:$0xf]
    %v65 = vld [vmem:[#allocation4 + $0x8] sm:$0xf]
    %v66 = vld [vmem:[#allocation4 + $0xc] sm:$0xf]
    %v67 = vld [vmem:[#allocation4 + $0x10] sm:$0xf]
    %v68 = vld [vmem:[#allocation4 + $0x14] sm:$0xf]
    %v69 = vld [vmem:[#allocation4 + $0x18] sm:$0xf]
    %v70 = vld [vmem:[#allocation4 + $0x1c] sm:$0xf]
    %v71 = vld [vmem:[#allocation4 + $0x20] sm:$0xf]
    %v72 = vld [vmem:[#allocation4 + $0x24] sm:$0xf]
    %v73 = vld [vmem:[#allocation4 + $0x28] sm:$0xf]
    %v74 = vld [vmem:[#allocation4 + $0x2c] sm:$0xf]
    %v75 = vld [vmem:[#allocation4 + $0x30] sm:$0xf]
    %v76 = vld [vmem:[#allocation4 + $0x34] sm:$0xf]
    %v77 = vld [vmem:[#allocation4 + $0x38] sm:$0xf]
    %v78 = vld [vmem:[#allocation4 + $0x3c] sm:$0xf]
    %v79 = vld [vmem:[#allocation4 + $0x40] sm:$0xf]
    %v80 = vld [vmem:[#allocation4 + $0x44] sm:$0xf]
    %v81 = vld [vmem:[#allocation4 + $0x48] sm:$0xf]
    %v82 = vld [vmem:[#allocation4 + $0x4c] sm:$0xf]
    %v83 = vld [vmem:[#allocation4 + $0x50] sm:$0xf]
    %v84 = vld [vmem:[#allocation4 + $0x54] sm:$0xf]
    %v85 = vld [vmem:[#allocation4 + $0x58] sm:$0xf]
    %v86 = vld [vmem:[#allocation4 + $0x5c] sm:$0xf]
    %v87 = vld [vmem:[#allocation4 + $0x60] sm:$0xf]
    %v88 = vld [vmem:[#allocation4 + $0x64] sm:$0xf]
    %v89 = vld [vmem:[#allocation4 + $0x68] sm:$0xf]
    %v90 = vld [vmem:[#allocation4 + $0x6c] sm:$0xf]
    %v91 = vld [vmem:[#allocation4 + $0x70] sm:$0xf]
    %v92 = vld [vmem:[#allocation4 + $0x74] sm:$0xf]
    %v93 = vld [vmem:[#allocation4 + $0x78] sm:$0xf]
    %v94 = vld [vmem:[#allocation4 + $0x7c] sm:$0xf]
    %v95 = vld [vmem:[%s3] sm:$0x1]
    %v97 = vlaneseq
    %v98 = vshrl.u32 %v97, 7
    %v99 = vsub.s32 0, %v98
    %v100 = vrot.slane %v95, %v99
    %v103 = vunpack.c.l.b16 %v62
    %v104 = vunpack.c.h.b16 %v62
    %v105 = vpack.c.b16 %v103, %v103
    %v106 = vpack.c.b16 %v104, %v104
    %v141 = vunpack.c.l.b16 %v63
    %v142 = vunpack.c.l.b16 %v64
    %v143 = vunpack.c.l.b16 %v65
    %v144 = vunpack.c.l.b16 %v66
    %v145 = vunpack.c.l.b16 %v67
    %v146 = vunpack.c.l.b16 %v68
    %v147 = vunpack.c.l.b16 %v69
    %v148 = vunpack.c.l.b16 %v70
    %v149 = vunpack.c.l.b16 %v71
    %v150 = vunpack.c.l.b16 %v72
    %v151 = vunpack.c.l.b16 %v73
    %v152 = vunpack.c.l.b16 %v74
    %v153 = vunpack.c.l.b16 %v75
    %v154 = vunpack.c.l.b16 %v76
    %v155 = vunpack.c.l.b16 %v77
    %v156 = vunpack.c.l.b16 %v78
    %v157 = vunpack.c.l.b16 %v79
    %v158 = vunpack.c.l.b16 %v80
    %v159 = vunpack.c.l.b16 %v81
    %v160 = vunpack.c.l.b16 %v82
    %v161 = vunpack.c.l.b16 %v83
    %v162 = vunpack.c.l.b16 %v84
    %v163 = vunpack.c.l.b16 %v85
    %v164 = vunpack.c.l.b16 %v86
    %v165 = vunpack.c.l.b16 %v87
    %v166 = vunpack.c.l.b16 %v88
    %v167 = vunpack.c.l.b16 %v89
    %v168 = vunpack.c.l.b16 %v90
    %v169 = vunpack.c.l.b16 %v91
    %v170 = vunpack.c.l.b16 %v92
    %v171 = vunpack.c.l.b16 %v93
    %v172 = vunpack.c.l.b16 %v94
    %v173 = vpack.c.b16 %v142, %v141
    %v174 = vpack.c.b16 %v144, %v143
    %v175 = vpack.c.b16 %v146, %v145
    %v176 = vpack.c.b16 %v148, %v147
    %v177 = vpack.c.b16 %v150, %v149
    %v178 = vpack.c.b16 %v152, %v151
    %v179 = vpack.c.b16 %v154, %v153
    %v180 = vpack.c.b16 %v156, %v155
    %v181 = vpack.c.b16 %v158, %v157
    %v182 = vpack.c.b16 %v160, %v159
    %v183 = vpack.c.b16 %v162, %v161
    %v184 = vpack.c.b16 %v164, %v163
    %v185 = vpack.c.b16 %v166, %v165
    %v186 = vpack.c.b16 %v168, %v167
    %v187 = vpack.c.b16 %v170, %v169
    %v188 = vpack.c.b16 %v172, %v171
    %205 = vmatprep.subr.bf16.mxu0 0
    %206 = vmatpush1.bf16.msra.mxu0 %v180
    %207 = vmatprep.subr.bf16.mxu0 0
    %208 = vmatpush1.bf16.msra.mxu0 %v179
    %209 = vmatprep.subr.bf16.mxu0 0
    %210 = vmatpush1.bf16.msra.mxu0 %v178
    %211 = vmatprep.subr.bf16.mxu0 0
    %212 = vmatpush1.bf16.msra.mxu0 %v177
    %213 = vmatprep.subr.bf16.mxu0 0
    %214 = vmatpush1.bf16.msra.mxu0 %v176
    %215 = vmatprep.subr.bf16.mxu0 0
    %216 = vmatpush1.bf16.msra.mxu0 %v175
    %217 = vmatprep.subr.bf16.mxu0 0
    %218 = vmatpush1.bf16.msra.mxu0 %v174
    %219 = vmatprep.subr.bf16.mxu0 0
    %220 = vmatpush1.bf16.msra.mxu0 %v173
    %221 = vmatprep.subr.bf16.mxu0 0
    %222 = vmatpush2.bf16.msra.mxu0 %v188
    %223 = vmatprep.subr.bf16.mxu0 0
    %224 = vmatpush2.bf16.msra.mxu0 %v187
    %225 = vmatprep.subr.bf16.mxu0 0
    %226 = vmatpush2.bf16.msra.mxu0 %v186
    %227 = vmatprep.subr.bf16.mxu0 0
    %228 = vmatpush2.bf16.msra.mxu0 %v185
    %229 = vmatprep.subr.bf16.mxu0 0
    %230 = vmatpush2.bf16.msra.mxu0 %v184
    %231 = vmatprep.subr.bf16.mxu0 0
    %232 = vmatpush2.bf16.msra.mxu0 %v183
    %233 = vmatprep.subr.bf16.mxu0 0
    %234 = vmatpush2.bf16.msra.mxu0 %v182
    %235 = vmatprep.subr.bf16.mxu0 0
    %236 = vmatpush2.bf16.msra.mxu0 %v181
    %237 = vmatprep.mubr.bf16.mxu0 %v106
    %238 = vmatmul.mubr.bf16.gmra.mxu0 %v105
    %v239 = vpop.f32.mrf.mxu0
    %v240 = vadd.f32 %v100, %v239
    %v241 = vpop.f32.mrf.mxu0
    %v242 = vpop.f32.mrf.mxu0
    %v243 = vpop.f32.mrf.mxu0
    %244 = vdwg.mxu0
    %v245 = vmax.f32 %v240, 0.0
    %v246 = vlaneseq
    %v247 = vshrl.u32 %v246, 7
    %v248 = vlaneseq
    %v249 = vand.u32 %v248, 127
    %s250 = sadd.s32 %s61, 656542357
    %v251 = vmul.u32 %v247, 2654435769
    %v252 = vstv %s250
    %v253 = vadd.s32 %v252, %v251
    %v254 = vmul.u32 %v249, 1818371886
    %v255 = vadd.s32 %v253, %v254
    %v256 = vshrl.u32 %v255, 16
    %v257 = vxor.u32 %v255, %v256
    %v258 = vmul.u32 %v257, 2146121005
    %v259 = vshrl.u32 %v258, 15
    %v260 = vxor.u32 %v258, %v259
    %v261 = vmul.u32 %v260, 2221713035
    %v262 = vshrl.u32 %v261, 16
    %v263 = vxor.u32 %v261, %v262
    %vm264 = vcmp.ge.u32.totalorder %v263, 2147483648
    %v265 = vmul.f32 %v245, 2.0
    %v266 = vsel %vm264, %v265, 0.0
    %v267 = vld [vmem:[%s4] sm:$0xf]
    %v268 = vld [vmem:[%s4 + $0x4] sm:$0xf]
    %v269 = vld [vmem:[%s4 + $0x8] sm:$0xf]
    %v270 = vld [vmem:[%s4 + $0xc] sm:$0xf]
    %v271 = vld [vmem:[%s4 + $0x10] sm:$0xf]
    %v272 = vld [vmem:[%s4 + $0x14] sm:$0xf]
    %v273 = vld [vmem:[%s4 + $0x18] sm:$0xf]
    %v274 = vld [vmem:[%s4 + $0x1c] sm:$0xf]
    %v275 = vld [vmem:[%s4 + $0x20] sm:$0xf]
    %v276 = vld [vmem:[%s4 + $0x24] sm:$0xf]
    %v277 = vld [vmem:[%s4 + $0x28] sm:$0xf]
    %v278 = vld [vmem:[%s4 + $0x2c] sm:$0xf]
    %v279 = vld [vmem:[%s4 + $0x30] sm:$0xf]
    %v280 = vld [vmem:[%s4 + $0x34] sm:$0xf]
    %v281 = vld [vmem:[%s4 + $0x38] sm:$0xf]
    %v282 = vld [vmem:[%s4 + $0x3c] sm:$0xf]
    %v283 = vld [vmem:[#allocation7] sm:$0x1]
    %v284 = vpack.c.bf16 %v266, %v266
    %v286 = vlaneseq
    %v287 = vshrl.u32 %v286, 7
    %v288 = vsub.s32 0, %v287
    %v289 = vrot.slane %v283, %v288
    %v307 = vunpack.c.l.b16 %v267
    %v308 = vunpack.c.l.b16 %v268
    %v309 = vunpack.c.l.b16 %v269
    %v310 = vunpack.c.l.b16 %v270
    %v311 = vunpack.c.l.b16 %v271
    %v312 = vunpack.c.l.b16 %v272
    %v313 = vunpack.c.l.b16 %v273
    %v314 = vunpack.c.l.b16 %v274
    %v315 = vunpack.c.l.b16 %v275
    %v316 = vunpack.c.l.b16 %v276
    %v317 = vunpack.c.l.b16 %v277
    %v318 = vunpack.c.l.b16 %v278
    %v319 = vunpack.c.l.b16 %v279
    %v320 = vunpack.c.l.b16 %v280
    %v321 = vunpack.c.l.b16 %v281
    %v322 = vunpack.c.l.b16 %v282
    %v323 = vpack.c.b16 %v308, %v307
    %v324 = vpack.c.b16 %v310, %v309
    %v325 = vpack.c.b16 %v312, %v311
    %v326 = vpack.c.b16 %v314, %v313
    %v327 = vpack.c.b16 %v316, %v315
    %v328 = vpack.c.b16 %v318, %v317
    %v329 = vpack.c.b16 %v320, %v319
    %v330 = vpack.c.b16 %v322, %v321
    %339 = vmatprep.subr.bf16.mxu0 0
    %340 = vmatpush1.bf16.msra.mxu0 %v330
    %341 = vmatprep.subr.bf16.mxu0 0
    %342 = vmatpush1.bf16.msra.mxu0 %v329
    %343 = vmatprep.subr.bf16.mxu0 0
    %344 = vmatpush1.bf16.msra.mxu0 %v328
    %345 = vmatprep.subr.bf16.mxu0 0
    %346 = vmatpush1.bf16.msra.mxu0 %v327
    %347 = vmatprep.subr.bf16.mxu0 0
    %348 = vmatpush1.bf16.msra.mxu0 %v326
    %349 = vmatprep.subr.bf16.mxu0 0
    %350 = vmatpush1.bf16.msra.mxu0 %v325
    %351 = vmatprep.subr.bf16.mxu0 0
    %352 = vmatpush1.bf16.msra.mxu0 %v324
    %353 = vmatprep.subr.bf16.mxu0 0
    %354 = vmatpush1.bf16.msra.mxu0 %v323
    %355 = vmatprep.subr.bf16.mxu0 0
    %356 = vmatpush2.bf16.msra.mxu0 0
    %357 = vmatprep.subr.bf16.mxu0 0
    %358 = vmatpush2.bf16.msra.mxu0 0
    %359 = vmatprep.subr.bf16.mxu0 0
    %360 = vmatpush2.bf16.msra.mxu0 0
    %361 = vmatprep.subr.bf16.mxu0 0
    %362 = vmatpush2.bf16.msra.mxu0 0
    %363 = vmatprep.subr.bf16.mxu0 0
    %364 = vmatpush2.bf16.msra.mxu0 0
    %365 = vmatprep.subr.bf16.mxu0 0
    %366 = vmatpush2.bf16.msra.mxu0 0
    %367 = vmatprep.subr.bf16.mxu0 0
    %368 = vmatpush2.bf16.msra.mxu0 0
    %369 = vmatprep.subr.bf16.mxu0 0
    %370 = vmatpush2.bf16.msra.mxu0 0
    %371 = vmatprep.mubr.bf16.mxu0 0
    %372 = vmatmul.mubr.bf16.gmra.mxu0 %v284
    %v373 = vpop.f32.mrf.mxu0
    %v374 = vadd.f32 %v289, %v373
    %v375 = vpop.f32.mrf.mxu0
    %v376 = vpop.f32.mrf.mxu0
    %v377 = vpop.f32.mrf.mxu0
    %378 = vdwg.mxu0
    %v379 = vmax.f32 %v374, 0.0
    %s380 = sadd.s32 %s61, 1313084714
    %v381 = vstv %s380
    %v382 = vadd.s32 %v381, %v251
    %v383 = vadd.s32 %v382, %v254
    %v384 = vshrl.u32 %v383, 16
    %v385 = vxor.u32 %v383, %v384
    %v386 = vmul.u32 %v385, 2146121005
    %v387 = vshrl.u32 %v386, 15
    %v388 = vxor.u32 %v386, %v387
    %v389 = vmul.u32 %v388, 2221713035
    %v390 = vshrl.u32 %v389, 16
    %v391 = vxor.u32 %v389, %v390
    %vm392 = vcmp.ge.u32.totalorder %v391, 2147483648
    %v393 = vmul.f32 %v379, 2.0
    %v394 = vsel %vm392, %v393, 0.0
    %v395 = vld [vmem:[%s6] sm:$0xf]
    %v396 = vld [vmem:[%s6 + $0x4] sm:$0xf]
    %v397 = vld [vmem:[%s6 + $0x8] sm:$0xf]
    %v398 = vld [vmem:[%s6 + $0xc] sm:$0xf]
    %v399 = vld [vmem:[%s6 + $0x10] sm:$0xf]
    %v400 = vld [vmem:[%s6 + $0x14] sm:$0xf]
    %v401 = vld [vmem:[%s6 + $0x18] sm:$0xf]
    %v402 = vld [vmem:[%s6 + $0x1c] sm:$0xf]
    %v403 = vld [vmem:[%s6 + $0x20] sm:$0xf]
    %v404 = vld [vmem:[%s6 + $0x24] sm:$0xf]
    %v405 = vld [vmem:[%s6 + $0x28] sm:$0xf]
    %v406 = vld [vmem:[%s6 + $0x2c] sm:$0xf]
    %v407 = vld [vmem:[%s6 + $0x30] sm:$0xf]
    %v408 = vld [vmem:[%s6 + $0x34] sm:$0xf]
    %v409 = vld [vmem:[%s6 + $0x38] sm:$0xf]
    %v410 = vld [vmem:[%s6 + $0x3c] sm:$0xf]
    %v411 = vld [vmem:[%s7] sm:$0x1]
    %v412 = vpack.c.bf16 %v394, %v394
    %v414 = vlaneseq
    %v415 = vshrl.u32 %v414, 7
    %v416 = vsub.s32 0, %v415
    %v417 = vrot.slane %v411, %v416
    %v435 = vunpack.c.l.b16 %v395
    %v436 = vunpack.c.l.b16 %v396
    %v437 = vunpack.c.l.b16 %v397
    %v438 = vunpack.c.l.b16 %v398
    %v439 = vunpack.c.l.b16 %v399
    %v440 = vunpack.c.l.b16 %v400
    %v441 = vunpack.c.l.b16 %v401
    %v442 = vunpack.c.l.b16 %v402
    %v443 = vunpack.c.l.b16 %v403
    %v444 = vunpack.c.l.b16 %v404
    %v445 = vunpack.c.l.b16 %v405
    %v446 = vunpack.c.l.b16 %v406
    %v447 = vunpack.c.l.b16 %v407
    %v448 = vunpack.c.l.b16 %v408
    %v449 = vunpack.c.l.b16 %v409
    %v450 = vunpack.c.l.b16 %v410
    %v451 = vpack.c.b16 %v436, %v435
    %v452 = vpack.c.b16 %v438, %v437
    %v453 = vpack.c.b16 %v440, %v439
    %v454 = vpack.c.b16 %v442, %v441
    %v455 = vpack.c.b16 %v444, %v443
    %v456 = vpack.c.b16 %v446, %v445
    %v457 = vpack.c.b16 %v448, %v447
    %v458 = vpack.c.b16 %v450, %v449
    %467 = vmatprep.subr.bf16.mxu0 0
    %468 = vmatpush1.bf16.msra.mxu0 %v458
    %469 = vmatprep.subr.bf16.mxu0 0
    %470 = vmatpush1.bf16.msra.mxu0 %v457
    %471 = vmatprep.subr.bf16.mxu0 0
    %472 = vmatpush1.bf16.msra.mxu0 %v456
    %473 = vmatprep.subr.bf16.mxu0 0
    %474 = vmatpush1.bf16.msra.mxu0 %v455
    %475 = vmatprep.subr.bf16.mxu0 0
    %476 = vmatpush1.bf16.msra.mxu0 %v454
    %477 = vmatprep.subr.bf16.mxu0 0
    %478 = vmatpush1.bf16.msra.mxu0 %v453
    %479 = vmatprep.subr.bf16.mxu0 0
    %480 = vmatpush1.bf16.msra.mxu0 %v452
    %481 = vmatprep.subr.bf16.mxu0 0
    %482 = vmatpush1.bf16.msra.mxu0 %v451
    %483 = vmatprep.subr.bf16.mxu0 0
    %484 = vmatpush2.bf16.msra.mxu0 0
    %485 = vmatprep.subr.bf16.mxu0 0
    %486 = vmatpush2.bf16.msra.mxu0 0
    %487 = vmatprep.subr.bf16.mxu0 0
    %488 = vmatpush2.bf16.msra.mxu0 0
    %489 = vmatprep.subr.bf16.mxu0 0
    %490 = vmatpush2.bf16.msra.mxu0 0
    %491 = vmatprep.subr.bf16.mxu0 0
    %492 = vmatpush2.bf16.msra.mxu0 0
    %493 = vmatprep.subr.bf16.mxu0 0
    %494 = vmatpush2.bf16.msra.mxu0 0
    %495 = vmatprep.subr.bf16.mxu0 0
    %496 = vmatpush2.bf16.msra.mxu0 0
    %497 = vmatprep.subr.bf16.mxu0 0
    %498 = vmatpush2.bf16.msra.mxu0 0
    %499 = vmatprep.mubr.bf16.mxu0 0
    %500 = vmatmul.mubr.bf16.gmra.mxu0 %v412
    %v501 = vpop.f32.mrf.mxu0
    %v502 = vadd.f32 %v417, %v501
    %v503 = vpop.f32.mrf.mxu0
    %v504 = vpop.f32.mrf.mxu0
    %v505 = vpop.f32.mrf.mxu0
    %506 = vdwg.mxu0
    %vm507 = vcmask 64512
    %508 = vst.msk [vmem:[#allocation9] sm:$0xff] %vm507, %v502
    // Predicated region
    $region38: #{tpu_custom_call.1} parent=1 // pred_check
      _
    $region39: #{tpu_custom_call.1} parent=1 // pred_check_branch
      %510 = sbr.rel (0) target = $region41
    $region40: #{tpu_custom_call.1} parent=1 // pred_region
      %s512 = ssub.s32 128, 128
      %513 = vsyncadd [#allocation6], %s512
      %s515 = sshll.u32 [#allocation9], 4
      %s516 = int_to_ptr.vmem [resolvable:$true] %s515
      %518 = dma.vmem_to_hbm [thread:$0]  %s516, 128, %s8, [#allocation6]
    $region41: #{tpu_custom_call.1} parent=1 // pred_fallthru
      _
    // Predicated region
    $region42: #{tpu_custom_call.1} parent=1 // pred_check
      _
    $region43: #{tpu_custom_call.1} parent=1 // pred_check_branch
      %520 = sbr.rel (0) target = $region45
    $region44: #{tpu_custom_call.1} parent=1 // pred_region
      %521 = dma.done [#allocation6], 128
    $region45: #{tpu_custom_call.1} parent=1 // pred_fallthru
      _
    %522 = vsyncpa [#allocation5], 1
    %523 = vsyncpa [#allocation8], 1
    %524 = vsyncpa [#allocation6], 1

</llo_original>
